<compile_context>
chip_gen: v7x
topology: tpu7x:2x2x1
jax: 0.10.0
libtpu: 0.0.40
codegen_flags: <defaults>
</compile_context>

<pallas_src>
import functools

import jax
import jax.numpy as jnp
import numpy as np
from jax.experimental import pallas as pl
from jax.experimental.pallas import tpu as pltpu

# ---------------- model hyper-params (small, consistent with the module) ----
VOCAB = 100
EMB_DIM = 32       # params.emb_dim
FILTERS = 16       # params.filters
KSIZE = 3          # params.kernel_size ("conv_tri", padding=1)
NTAGS = 8          # ntags
B = 2              # batch of sentences
T = 16             # sequence length
PAD = 1            # Conv1d padding=1  -> T_out == T for K=3


# ---------------- Pallas kernel: embed + conv1d + max + relu + linear -------
def classify_kernel(ids_ref, emb_ref, wconv_ref, bconv_ref, wlin_ref,
                    blin_ref, out_ref, *, batch, seq, vocab):
    # ids_ref:   (B*T, 1)   int32 token ids (row-major over (B, T))
    # emb_ref:   (V, E)     embedding table
    # wconv_ref: (K*E, F)   conv taps flattened as row = k*E + e
    # bconv_ref: (1, F)     conv bias
    # wlin_ref:  (F, NTAGS) linear weight (transposed)
    # blin_ref:  (1, NTAGS) linear bias
    # out_ref:   (B, NTAGS)
    bt = batch * seq
    filters = wconv_ref.shape[-1]

    # ---- fused embedding gather: one-hot @ table (exact, single MXU op) ----
    ids = ids_ref[...]                                             # (BT, 1)
    onehot = (jax.lax.broadcasted_iota(jnp.int32, (bt, vocab), 1)
              == ids).astype(jnp.float32)                          # (BT, V)
    x = jnp.dot(onehot, emb_ref[...],
                preferred_element_type=jnp.float32)                # (BT, E)

    # ---- sentence-boundary masks (rows with t == 0 / t == T-1) -------------
    row = jax.lax.broadcasted_iota(jnp.int32, (bt, 1), 0)
    is_first = row == 0
    is_last = row == (seq - 1)
    for b in range(1, batch):                                      # tiny static
        is_first = jnp.logical_or(is_first, row == b * seq)
        is_last = jnp.logical_or(is_last, row == b * seq + seq - 1)

    # ---- Conv1d(K=3, padding=1) as ONE im2col matmul ------------------------
    # Time shifts via sublane rotation; padding handled by the boundary masks
    # (no sublane-offset slices, no materialized padded buffer).
    x_prev = jnp.where(is_first, 0.0, pltpu.roll(x, shift=1, axis=0))      # x[t-1]
    x_next = jnp.where(is_last, 0.0, pltpu.roll(x, shift=bt - 1, axis=0))  # x[t+1]
    im2col = jnp.concatenate([x_prev, x, x_next], axis=1)          # (BT, K*E)
    conv = jnp.dot(im2col, wconv_ref[...],
                   preferred_element_type=jnp.float32)             # (BT, F)

    # ---- max over time (conv bias hoisted past the max) + relu -------------
    h = jnp.max(conv.reshape(batch, seq, filters), axis=1)         # (B, F)
    h = jnp.maximum(h + bconv_ref[...], 0.0)                       # relu (dropout=id)

    # ---- linear classifier ---------------------------------------------------
    out_ref[...] = (jnp.dot(h, wlin_ref[...],
                            preferred_element_type=jnp.float32)
                    + blin_ref[...])


def classify_forward(input_sents, emb_table, w_conv_flat, b_conv, w_lin, b_lin):
    b, t = input_sents.shape
    vocab, e = emb_table.shape
    ke, f = w_conv_flat.shape
    ntags = w_lin.shape[-1]
    assert ke == 3 * e, "kernel implements the K=3 / padding=1 'conv_tri' path"

    bt = b * t
    ids = input_sents.reshape(bt, 1).astype(jnp.int32)   # metadata-only reshape

    flops = 2 * (bt * vocab * e + bt * ke * f + b * f * ntags)
    bytes_accessed = 4 * (bt + vocab * e + ke * f + f + f * ntags
                          + ntags + b * ntags)

    kernel = functools.partial(classify_kernel, batch=b, seq=t, vocab=vocab)
    vmem = pl.BlockSpec(memory_space=pltpu.MemorySpace.VMEM)
    return pl.pallas_call(
        kernel,
        out_shape=jax.ShapeDtypeStruct((b, ntags), jnp.float32),
        in_specs=[vmem] * 6,
        out_specs=vmem,
        cost_estimate=pl.CostEstimate(flops=flops, transcendentals=0,
                                      bytes_accessed=bytes_accessed),
    )(ids, emb_table, w_conv_flat, b_conv, w_lin, b_lin)
    # TODO(synk): if B/T/F ever scale up, add a batch grid with
    # dimension_semantics=("parallel",) (v7x dual TensorCore) and 128-padded
    # lane-dense weights/outputs.


# ---------------- pure-JAX reference (matches PyTorch semantics) ------------
def reference_forward(input_sents, emb_table, w_conv, b_conv, w_lin, b_lin):
    embeds = emb_table[input_sents]                        # (B, T, E)
    x_ncl = jnp.transpose(embeds, (0, 2, 1))               # (B, E, T)  NCL
    w_oik = jnp.transpose(w_conv, (2, 1, 0))               # (F, E, K)  OIK
    conv = jax.lax.conv_general_dilated(
        x_ncl, w_oik, window_strides=(1,), padding=((PAD, PAD),),
        dimension_numbers=("NCH", "OIH", "NCH"))
    conv = conv + b_conv.reshape(1, -1, 1)                 # (B, F, T)
    h = jnp.maximum(jnp.max(conv, axis=2), 0.0)            # (B, F)
    return h @ w_lin + b_lin                               # (B, NTAGS)


if __name__ == "__main__":
    key = jax.random.PRNGKey(0)
    k_emb, k_wc, k_bc, k_wl, k_bl, k_sent = jax.random.split(key, 6)

    # Embedding: xavier_uniform_
    limit_emb = float(np.sqrt(6.0 / (VOCAB + EMB_DIM)))
    emb_table = jax.random.uniform(
        k_emb, (VOCAB, EMB_DIM), jnp.float32, -limit_emb, limit_emb)

    # Conv1d(E -> F, K): natural (K, E, F) layout; flattened once for kernel.
    fan_in_conv = EMB_DIM * KSIZE
    lim_c = float(1.0 / np.sqrt(fan_in_conv))
    w_conv = jax.random.uniform(
        k_wc, (KSIZE, EMB_DIM, FILTERS), jnp.float32, -lim_c, lim_c)
    w_conv_flat = w_conv.reshape(KSIZE * EMB_DIM, FILTERS)   # row = k*E + e
    b_conv = jax.random.uniform(k_bc, (1, FILTERS), jnp.float32, -lim_c, lim_c)

    # Linear(F -> NTAGS): stored as (F, NTAGS)
    lim_l = float(1.0 / np.sqrt(FILTERS))
    w_lin = jax.random.uniform(
        k_wl, (FILTERS, NTAGS), jnp.float32, -lim_l, lim_l)
    b_lin = jax.random.uniform(k_bl, (1, NTAGS), jnp.float32, -lim_l, lim_l)

    # inputs: token ids + (unused by CnnEncoder) sequence lengths
    input_sents = jax.random.randint(k_sent, (B, T), 0, VOCAB, dtype=jnp.int32)
    input_lens = jnp.full((B,), T, dtype=jnp.int32)  # unused on the CNN path

    fwd = jax.jit(classify_forward)
    out = fwd(input_sents, emb_table, w_conv_flat, b_conv, w_lin, b_lin)
    out = jax.block_until_ready(out)

    ref = reference_forward(input_sents, emb_table, w_conv, b_conv,
                            w_lin, b_lin)
    np.testing.assert_allclose(np.asarray(out), np.asarray(ref),
                               rtol=1e-4, atol=1e-4)
    assert out.shape == (B, NTAGS)
    print("KERNEL_OK")
</pallas_src>

<mosaic_0001>
module attributes {stable_mosaic.version = 11 : i64} {
  func.func @classify_kernel(%arg0: memref<32x1xi32, #tpu.memory_space<vmem>>, %arg1: memref<100x32xf32, #tpu.memory_space<vmem>>, %arg2: memref<96x16xf32, #tpu.memory_space<vmem>>, %arg3: memref<1x16xf32, #tpu.memory_space<vmem>>, %arg4: memref<16x8xf32, #tpu.memory_space<vmem>>, %arg5: memref<1x8xf32, #tpu.memory_space<vmem>>, %arg6: memref<2x8xf32, #tpu.memory_space<vmem>>) attributes {dimension_semantics = [], scalar_prefetch = 0 : i64, scratch_operands = 0 : i64, tpu.core_type = #tpu.core_type<tc>} {
    %c0 = arith.constant 0 : index
    %c0_0 = arith.constant 0 : index
    %0 = vector.load %arg0[%c0, %c0_0] : memref<32x1xi32, #tpu.memory_space<vmem>>, vector<32x1xi32>
    %1 = tpu.iota {dimensions = array<i32: 1>} : vector<32x100xi32>
    %2 = vector.broadcast %0 : vector<32x1xi32> to vector<32x100xi32>
    %3 = arith.cmpi eq, %1, %2 : vector<32x100xi32>
    %4 = arith.extui %3 : vector<32x100xi1> to vector<32x100xi32>
    %5 = arith.sitofp %4 : vector<32x100xi32> to vector<32x100xf32>
    %c0_1 = arith.constant 0 : index
    %c0_2 = arith.constant 0 : index
    %6 = vector.load %arg1[%c0_1, %c0_2] : memref<100x32xf32, #tpu.memory_space<vmem>>, vector<100x32xf32>
    %cst = arith.constant dense<0.000000e+00> : vector<32x32xf32>
    %7 = tpu.matmul %5, %6, %cst {dimension_numbers = #tpu.dot_dimension_numbers<[1], [0], [0], [1], [0, 0, 1, 1], [], []>} : vector<32x100xf32>, vector<100x32xf32>, vector<32x32xf32> -> vector<32x32xf32>
    %8 = tpu.iota {dimensions = array<i32: 0>} : vector<32x1xi32>
    %c0_i32 = arith.constant 0 : i32
    %9 = vector.broadcast %c0_i32 : i32 to vector<32x1xi32>
    %10 = arith.cmpi eq, %8, %9 : vector<32x1xi32>
    %c15_i32 = arith.constant 15 : i32
    %11 = vector.broadcast %c15_i32 : i32 to vector<32x1xi32>
    %12 = arith.cmpi eq, %8, %11 : vector<32x1xi32>
    %c16_i32 = arith.constant 16 : i32
    %13 = vector.broadcast %c16_i32 : i32 to vector<32x1xi32>
    %14 = arith.cmpi eq, %8, %13 : vector<32x1xi32>
    %15 = arith.ori %10, %14 : vector<32x1xi1>
    %c31_i32 = arith.constant 31 : i32
    %16 = vector.broadcast %c31_i32 : i32 to vector<32x1xi32>
    %17 = arith.cmpi eq, %8, %16 : vector<32x1xi32>
    %18 = arith.ori %12, %17 : vector<32x1xi1>
    %c1_i32 = arith.constant 1 : i32
    %19 = tpu.dynamic_rotate %7 by %c1_i32 dim 0 : vector<32x32xf32>, i32 -> vector<32x32xf32>
    %cst_3 = arith.constant 0.000000e+00 : f32
    %20 = vector.shape_cast %15 : vector<32x1xi1> to vector<32x1xi1>
    %21 = vector.broadcast %20 : vector<32x1xi1> to vector<32x32xi1>
    %22 = vector.broadcast %cst_3 : f32 to vector<32x32xf32>
    %23 = arith.select %21, %22, %19 : vector<32x32xi1>, vector<32x32xf32>
    %c31_i32_4 = arith.constant 31 : i32
    %24 = tpu.dynamic_rotate %7 by %c31_i32_4 dim 0 : vector<32x32xf32>, i32 -> vector<32x32xf32>
    %cst_5 = arith.constant 0.000000e+00 : f32
    %25 = vector.shape_cast %18 : vector<32x1xi1> to vector<32x1xi1>
    %26 = vector.broadcast %25 : vector<32x1xi1> to vector<32x32xi1>
    %27 = vector.broadcast %cst_5 : f32 to vector<32x32xf32>
    %28 = arith.select %26, %27, %24 : vector<32x32xi1>, vector<32x32xf32>
    %29 = tpu.concatenate %23, %7, %28 in 1 : vector<32x32xf32>, vector<32x32xf32>, vector<32x32xf32> -> vector<32x96xf32>
    %c0_6 = arith.constant 0 : index
    %c0_7 = arith.constant 0 : index
    %30 = vector.load %arg2[%c0_6, %c0_7] : memref<96x16xf32, #tpu.memory_space<vmem>>, vector<96x16xf32>
    %cst_8 = arith.constant dense<0.000000e+00> : vector<32x16xf32>
    %31 = tpu.matmul %29, %30, %cst_8 {dimension_numbers = #tpu.dot_dimension_numbers<[1], [0], [0], [1], [0, 0, 1, 1], [], []>} : vector<32x96xf32>, vector<96x16xf32>, vector<32x16xf32> -> vector<32x16xf32>
    %32 = vector.shape_cast %31 : vector<32x16xf32> to vector<2x16x16xf32>
    %cst_9 = arith.constant dense<0xFF800000> : vector<2x16xf32>
    %33 = vector.multi_reduction <maximumf>, %32, %cst_9 [1] : vector<2x16x16xf32> to vector<2x16xf32>
    %c0_10 = arith.constant 0 : index
    %c0_11 = arith.constant 0 : index
    %34 = vector.load %arg3[%c0_10, %c0_11] : memref<1x16xf32, #tpu.memory_space<vmem>>, vector<1x16xf32>
    %35 = vector.broadcast %34 : vector<1x16xf32> to vector<2x16xf32>
    %36 = arith.addf %33, %35 : vector<2x16xf32>
    %cst_12 = arith.constant 0.000000e+00 : f32
    %37 = vector.broadcast %cst_12 : f32 to vector<2x16xf32>
    %38 = arith.maximumf %36, %37 : vector<2x16xf32>
    %c0_13 = arith.constant 0 : index
    %c0_14 = arith.constant 0 : index
    %39 = vector.load %arg4[%c0_13, %c0_14] : memref<16x8xf32, #tpu.memory_space<vmem>>, vector<16x8xf32>
    %cst_15 = arith.constant dense<0.000000e+00> : vector<2x8xf32>
    %40 = tpu.matmul %38, %39, %cst_15 {dimension_numbers = #tpu.dot_dimension_numbers<[1], [0], [0], [1], [0, 0, 1, 1], [], []>} : vector<2x16xf32>, vector<16x8xf32>, vector<2x8xf32> -> vector<2x8xf32>
    %c0_16 = arith.constant 0 : index
    %c0_17 = arith.constant 0 : index
    %41 = vector.load %arg5[%c0_16, %c0_17] : memref<1x8xf32, #tpu.memory_space<vmem>>, vector<1x8xf32>
    %42 = vector.broadcast %41 : vector<1x8xf32> to vector<2x8xf32>
    %43 = arith.addf %40, %42 : vector<2x8xf32>
    %c0_18 = arith.constant 0 : index
    %c0_19 = arith.constant 0 : index
    %44 = vector.load %arg6[%c0_18, %c0_19] : memref<2x8xf32, #tpu.memory_space<vmem>>, vector<2x8xf32>
    tpu.vector_store %arg6[%c0_18, %c0_19], %43 {strides = array<i32>} : memref<2x8xf32, #tpu.memory_space<vmem>>, vector<2x8xf32>,
    return
  }
}

</mosaic_0001>

<llo_original>
// kernel: classify_forward.1
$region0: #{classify_forward.1}
  #allocation0 [shape = 'u32[]', space=smem, size = 0x4, offset = 0x4, fixed_abs, tag = 'smem constant byte address 0x4 - core index']
  #allocation1 [shape = 'u32[144,128]{1,0:T(1,128)}', space=vmem, size = 0x12000, scoped, tag = 'internal scratch']
  %s0 = inlined_call_operand.vmem [shape: s32[32,1], index: 0, kind: input, shape index: {}]
  %s1 = inlined_call_operand.vmem [shape: f32[100,32], index: 1, kind: input, shape index: {}]
  %s2 = inlined_call_operand.vmem [shape: f32[96,16], index: 2, kind: input, shape index: {}]
  %s3 = inlined_call_operand.vmem [shape: f32[1,16], index: 3, kind: input, shape index: {}]
  %s4 = inlined_call_operand.vmem [shape: f32[16,8], index: 4, kind: input, shape index: {}]
  %s5 = inlined_call_operand.vmem [shape: f32[1,8], index: 5, kind: input, shape index: {}]
  %s6 = inlined_call_operand.hbm [shape: f32[2,8], index: 6, kind: output, shape index: {}]
  %s7 = sld [smem:[#allocation0]]
  $region34: #{classify_forward.1} parent=0
    _
  %s9 = ssub.s32 1, %s7
  %s10 = scalar_select 0, %s9, %s7
  $region1: #{classify_forward.1} parent=0
    #allocation2 [shape = 'u8[1024]{0}', space=vmem, size = 0x400, scoped, tag = 'output window, operand 0, single buffered']
    #allocation3 [shape = 's32[1]{0}', space=sflag, size = 0x4, scoped, tag = 'scoped memory for classify_forward.1']
    %11 = vsyncpa [#allocation3], 0
    // Predicated region
    $region2: #{classify_forward.1} parent=1 // pred_check
      _
    $region3: #{classify_forward.1} parent=1 // pred_check_branch
      %13 = sbr.rel (0) target = $region5
    $region4: #{classify_forward.1} parent=1 // pred_region
      _
    $region5: #{classify_forward.1} parent=1 // pred_fallthru
      _
    // Predicated region
    $region6: #{classify_forward.1} parent=1 // pred_check
      _
    $region7: #{classify_forward.1} parent=1 // pred_check_branch
      %15 = sbr.rel (0) target = $region9
    $region8: #{classify_forward.1} parent=1 // pred_region
      _
    $region9: #{classify_forward.1} parent=1 // pred_fallthru
      _
    // Predicated region
    $region10: #{classify_forward.1} parent=1 // pred_check
      _
    $region11: #{classify_forward.1} parent=1 // pred_check_branch
      %17 = sbr.rel (0) target = $region13
    $region12: #{classify_forward.1} parent=1 // pred_region
      _
    $region13: #{classify_forward.1} parent=1 // pred_fallthru
      _
    // Predicated region
    $region14: #{classify_forward.1} parent=1 // pred_check
      _
    $region15: #{classify_forward.1} parent=1 // pred_check_branch
      %19 = sbr.rel (0) target = $region17
    $region16: #{classify_forward.1} parent=1 // pred_region
      _
    $region17: #{classify_forward.1} parent=1 // pred_fallthru
      _
    // Predicated region
    $region18: #{classify_forward.1} parent=1 // pred_check
      _
    $region19: #{classify_forward.1} parent=1 // pred_check_branch
      %21 = sbr.rel (0) target = $region21
    $region20: #{classify_forward.1} parent=1 // pred_region
      _
    $region21: #{classify_forward.1} parent=1 // pred_fallthru
      _
    // Predicated region
    $region22: #{classify_forward.1} parent=1 // pred_check
      _
    $region23: #{classify_forward.1} parent=1 // pred_check_branch
      %23 = sbr.rel (0) target = $region25
    $region24: #{classify_forward.1} parent=1 // pred_region
      _
    $region25: #{classify_forward.1} parent=1 // pred_fallthru
      _
    %v24 = vld [vmem:[%s0] sm:$0xff]
    %v25 = vld [vmem:[%s0 + $0x8] sm:$0xff]
    %v26 = vld [vmem:[%s0 + $0x10] sm:$0xff]
    %v27 = vld [vmem:[%s0 + $0x18] sm:$0xff]
    %v28 = vlaneseq
    %v29 = vand.u32 %v28, 127
    %30 = vset.pattern.permute.xlu0 0
    %31 = vperm.xlu0 %30, %v24
    %v32 = vpop.permute.xlu0 %31
    %33 = vset.pattern.permute.xlu0 0
    %34 = vperm.xlu0 %33, %v25
    %v35 = vpop.permute.xlu0 %34
    %36 = vset.pattern.permute.xlu0 0
    %37 = vperm.xlu0 %36, %v26
    %v38 = vpop.permute.xlu0 %37
    %39 = vset.pattern.permute.xlu0 0
    %40 = vperm.xlu0 %39, %v27
    %v41 = vpop.permute.xlu0 %40
    %vm42 = vcmp.eq.s32.totalorder %v29, %v32
    %vm43 = vcmp.eq.s32.totalorder %v29, %v35
    %vm44 = vcmp.eq.s32.totalorder %v29, %v38
    %vm45 = vcmp.eq.s32.totalorder %v29, %v41
    %v46 = vsel %vm42, 1, 0
    %v47 = vsel %vm43, 1, 0
    %v48 = vsel %vm44, 1, 0
    %v49 = vsel %vm45, 1, 0
    %v50 = vcvt.s32.f32 %v46
    %v51 = vcvt.s32.f32 %v47
    %v52 = vcvt.s32.f32 %v48
    %v53 = vcvt.s32.f32 %v49
    %v54 = vld [vmem:[%s1] sm:$0xff]
    %v55 = vld [vmem:[%s1 + $0x8] sm:$0xff]
    %v56 = vld [vmem:[%s1 + $0x10] sm:$0xff]
    %v57 = vld [vmem:[%s1 + $0x18] sm:$0xff]
    %v58 = vld [vmem:[%s1 + $0x20] sm:$0xff]
    %v59 = vld [vmem:[%s1 + $0x28] sm:$0xff]
    %v60 = vld [vmem:[%s1 + $0x30] sm:$0xff]
    %v61 = vld [vmem:[%s1 + $0x38] sm:$0xff]
    %v62 = vld [vmem:[%s1 + $0x40] sm:$0xff]
    %v63 = vld [vmem:[%s1 + $0x48] sm:$0xff]
    %v64 = vld [vmem:[%s1 + $0x50] sm:$0xff]
    %v65 = vld [vmem:[%s1 + $0x58] sm:$0xff]
    %v66 = vld [vmem:[%s1 + $0x60] sm:$0xf]
    %vm67 = vcmask 818176
    %v69 = vsel %vm67, %v50, 0
    %v72 = vsel %vm67, %v51, 0
    %v75 = vsel %vm67, %v52, 0
    %v78 = vsel %vm67, %v53, 0
    %vm80 = vcmask 1043456
    %v82 = vsel %vm80, %v66, 0
    %84 = vmatprep.subr.mxu0 0.0
    %85 = vmatpush1.msra.mxu0 %v54
    %86 = vmatprep.subr.mxu0 0.0
    %87 = vmatpush1.msra.mxu0 %v55
    %88 = vmatprep.subr.mxu0 0.0
    %89 = vmatpush1.msra.mxu0 %v56
    %90 = vmatprep.subr.mxu0 0.0
    %91 = vmatpush1.msra.mxu0 %v57
    %92 = vmatprep.subr.mxu0 0.0
    %93 = vmatpush1.msra.mxu0 %v58
    %94 = vmatprep.subr.mxu0 0.0
    %95 = vmatpush1.msra.mxu0 %v59
    %96 = vmatprep.subr.mxu0 0.0
    %97 = vmatpush1.msra.mxu0 %v60
    %98 = vmatprep.subr.mxu0 0.0
    %99 = vmatpush1.msra.mxu0 %v61
    %100 = vmatprep.subr.mxu0 0.0
    %101 = vmatpush1.msra.mxu0 %v62
    %102 = vmatprep.subr.mxu0 0.0
    %103 = vmatpush1.msra.mxu0 %v63
    %104 = vmatprep.subr.mxu0 0.0
    %105 = vmatpush1.msra.mxu0 %v64
    %106 = vmatprep.subr.mxu0 0.0
    %107 = vmatpush1.msra.mxu0 %v65
    %108 = vmatprep.subr.mxu0 0.0
    %109 = vmatpush1.msra.mxu0 %v82
    %110 = vmatprep.subr.mxu0 0.0
    %111 = vmatpush1.msra.mxu0 0.0
    %112 = vmatprep.subr.mxu0 0.0
    %113 = vmatpush1.msra.mxu0 0.0
    %114 = vmatprep.subr.mxu0 0.0
    %115 = vmatpush1.msra.mxu0 0.0
    %116 = vmatprep.subr.mxu0 0.0
    %117 = vmatpush1.msra.mxu0 0.0
    %118 = vmatprep.subr.mxu0 0.0
    %119 = vmatpush1.msra.mxu0 0.0
    %120 = vmatprep.subr.mxu0 0.0
    %121 = vmatpush1.msra.mxu0 0.0
    %122 = vmatprep.subr.mxu0 0.0
    %123 = vmatpush1.msra.mxu0 0.0
    %124 = vmatprep.subr.mxu0 0.0
    %125 = vmatpush1.msra.mxu0 0.0
    %126 = vmatprep.subr.mxu0 0.0
    %127 = vmatpush1.msra.mxu0 0.0
    %128 = vmatprep.subr.mxu0 0.0
    %129 = vmatpush1.msra.mxu0 0.0
    %130 = vmatprep.subr.mxu0 0.0
    %131 = vmatpush1.msra.mxu0 0.0
    %132 = vmatprep.subr.mxu0 0.0
    %133 = vmatpush1.msra.mxu0 0.0
    %134 = vmatprep.subr.mxu0 0.0
    %135 = vmatpush1.msra.mxu0 0.0
    %136 = vmatprep.subr.mxu0 0.0
    %137 = vmatpush1.msra.mxu0 0.0
    %138 = vmatprep.subr.mxu0 0.0
    %139 = vmatpush1.msra.mxu0 0.0
    %140 = vmatprep.subr.mxu0 0.0
    %141 = vmatpush1.msra.mxu0 0.0
    %142 = vmatprep.subr.mxu0 0.0
    %143 = vmatpush1.msra.mxu0 0.0
    %144 = vmatprep.subr.mxu0 0.0
    %145 = vmatpush1.msra.mxu0 0.0
    %146 = vmatprep.subr.mxu0 0.0
    %147 = vmatpush1.msra.mxu0 0.0
    %148 = vmatprep.mubr.f32.mxu0 0.0
    %149 = vmatmul.mubr.f32.gmra.mrb[0].mxu0 %v69
    %v150 = vpop.f32.mrb[0].mxu0
    %v151 = vadd.f32 0.0, %v150
    %v152 = vpop.f32.mrb[0].mxu0
    %153 = vmatprep.mubr.f32.mxu0 0.0
    %154 = vmatmul.mubr.f32.gmra.mrb[0].mxu0 %v72
    %v155 = vpop.f32.mrb[0].mxu0
    %v156 = vadd.f32 0.0, %v155
    %v157 = vpop.f32.mrb[0].mxu0
    %158 = vmatprep.mubr.f32.mxu0 0.0
    %159 = vmatmul.mubr.f32.gmra.mrb[0].mxu0 %v75
    %v160 = vpop.f32.mrb[0].mxu0
    %v161 = vadd.f32 0.0, %v160
    %v162 = vpop.f32.mrb[0].mxu0
    %163 = vmatprep.mubr.f32.mxu0 0.0
    %164 = vmatmul.mubr.f32.gmra.mrb[0].mxu0 %v78
    %v165 = vpop.f32.mrb[0].mxu0
    %v166 = vadd.f32 0.0, %v165
    %v167 = vpop.f32.mrb[0].mxu0
    %168 = vdwg.mxu0
    %v169 = vlaneseq
    %v170 = vshrl.u32 %v169, 7
    %v171 = vadd.s32 %v170, 8
    %v172 = vadd.s32 %v170, 16
    %v173 = vadd.s32 %v170, 24
    %vm174 = vcmp.eq.s32.totalorder %v170, 0
    %vm175 = vcmp.eq.s32.totalorder %v171, 0
    %vm176 = vcmp.eq.s32.totalorder %v172, 0
    %vm177 = vcmp.eq.s32.totalorder %v173, 0
    %vm178 = vcmp.eq.s32.totalorder %v170, 15
    %vm179 = vcmp.eq.s32.totalorder %v171, 15
    %vm180 = vcmp.eq.s32.totalorder %v172, 15
    %vm181 = vcmp.eq.s32.totalorder %v173, 15
    %vm182 = vcmp.eq.s32.totalorder %v170, 16
    %vm183 = vcmp.eq.s32.totalorder %v171, 16
    %vm184 = vcmp.eq.s32.totalorder %v172, 16
    %vm185 = vcmp.eq.s32.totalorder %v173, 16
    %vm186 = vmor %vm174, %vm182
    %vm187 = vmor %vm175, %vm183
    %vm188 = vmor %vm176, %vm184
    %vm189 = vmor %vm177, %vm185
    %vm190 = vcmp.eq.s32.totalorder %v170, 31
    %vm191 = vcmp.eq.s32.totalorder %v171, 31
    %vm192 = vcmp.eq.s32.totalorder %v172, 31
    %vm193 = vcmp.eq.s32.totalorder %v173, 31
    %vm194 = vmor %vm178, %vm190
    %vm195 = vmor %vm179, %vm191
    %vm196 = vmor %vm180, %vm192
    %vm197 = vmor %vm181, %vm193
    %v198 = vrot.slane %v151, 7
    %v199 = vrot.slane %v156, 7
    %v200 = vrot.slane %v161, 7
    %v201 = vrot.slane %v166, 7
    %vm202 = vcmp.lt.s32.totalorder %v170, 1
    %v203 = vsel %vm202, %v200, %v201
    %v204 = vsel %vm202, %v199, %v200
    %v205 = vsel %vm202, %v198, %v199
    %v206 = vsel %vm202, %v201, %v198
    %v207 = vsel %vm186, 1, 0
    %v208 = vsel %vm187, 1, 0
    %v209 = vsel %vm188, 1, 0
    %v210 = vsel %vm189, 1, 0
    %vm211 = vcmp.eq.s32.totalorder %v207, 1
    %vm212 = vcmp.eq.s32.totalorder %v208, 1
    %vm213 = vcmp.eq.s32.totalorder %v209, 1
    %vm214 = vcmp.eq.s32.totalorder %v210, 1
    %v215 = vsel %vm211, 0.0, %v206
    %v216 = vsel %vm212, 0.0, %v205
    %v217 = vsel %vm213, 0.0, %v204
    %v218 = vsel %vm214, 0.0, %v203
    %v219 = vrot.slane %v151, 1
    %v220 = vrot.slane %v156, 1
    %v221 = vrot.slane %v161, 1
    %v222 = vrot.slane %v166, 1
    %vm223 = vcmp.lt.s32.totalorder %v170, 7
    %v224 = vsel %vm223, %v221, %v222
    %v225 = vsel %vm223, %v220, %v221
    %v226 = vsel %vm223, %v219, %v220
    %v227 = vsel %vm223, %v222, %v219
    %v228 = vsel %vm194, 1, 0
    %v229 = vsel %vm195, 1, 0
    %v230 = vsel %vm196, 1, 0
    %v231 = vsel %vm197, 1, 0
    %vm232 = vcmp.eq.s32.totalorder %v228, 1
    %vm233 = vcmp.eq.s32.totalorder %v229, 1
    %vm234 = vcmp.eq.s32.totalorder %v230, 1
    %vm235 = vcmp.eq.s32.totalorder %v231, 1
    %v236 = vsel %vm232, 0.0, %v226
    %v237 = vsel %vm233, 0.0, %v225
    %v238 = vsel %vm234, 0.0, %v224
    %v239 = vsel %vm235, 0.0, %v227
    %244 = vrot.lane.b32.xlu0 %v151, 32
    %v245 = vpop.permute.xlu0 %244
    %246 = vrot.lane.b32.xlu0 %v156, 32
    %v247 = vpop.permute.xlu0 %246
    %248 = vrot.lane.b32.xlu0 %v161, 32
    %v249 = vpop.permute.xlu0 %248
    %250 = vrot.lane.b32.xlu0 %v166, 32
    %v251 = vpop.permute.xlu0 %250
    %260 = vrot.lane.b32.xlu0 %v236, 64
    %v261 = vpop.permute.xlu0 %260
    %262 = vrot.lane.b32.xlu0 %v237, 64
    %v263 = vpop.permute.xlu0 %262
    %264 = vrot.lane.b32.xlu0 %v238, 64
    %v265 = vpop.permute.xlu0 %264
    %266 = vrot.lane.b32.xlu0 %v239, 64
    %v267 = vpop.permute.xlu0 %266
    %vm272 = vcmask 261120
    %v273 = vsel %vm272, %v215, %v245
    %v274 = vsel %vm272, %v216, %v247
    %v275 = vsel %vm272, %v217, %v249
    %v276 = vsel %vm272, %v218, %v251
    %vm277 = vcmask 523264
    %v278 = vsel %vm277, %v273, %v261
    %v279 = vsel %vm277, %v274, %v263
    %v280 = vsel %vm277, %v275, %v265
    %v281 = vsel %vm277, %v276, %v267
    %v282 = vld [vmem:[%s2] sm:$0xff]
    %v283 = vld [vmem:[%s2 + $0x8] sm:$0xff]
    %v284 = vld [vmem:[%s2 + $0x10] sm:$0xff]
    %v285 = vld [vmem:[%s2 + $0x18] sm:$0xff]
    %v286 = vld [vmem:[%s2 + $0x20] sm:$0xff]
    %v287 = vld [vmem:[%s2 + $0x28] sm:$0xff]
    %v288 = vld [vmem:[%s2 + $0x30] sm:$0xff]
    %v289 = vld [vmem:[%s2 + $0x38] sm:$0xff]
    %v290 = vld [vmem:[%s2 + $0x40] sm:$0xff]
    %v291 = vld [vmem:[%s2 + $0x48] sm:$0xff]
    %v292 = vld [vmem:[%s2 + $0x50] sm:$0xff]
    %v293 = vld [vmem:[%s2 + $0x58] sm:$0xff]
    %vm294 = vcmask 785408
    %v296 = vsel %vm294, %v278, 0
    %v299 = vsel %vm294, %v279, 0
    %v302 = vsel %vm294, %v280, 0
    %v305 = vsel %vm294, %v281, 0
    %307 = vmatprep.subr.mxu0 0.0
    %308 = vmatpush1.msra.mxu0 %v282
    %309 = vmatprep.subr.mxu0 0.0
    %310 = vmatpush1.msra.mxu0 %v283
    %311 = vmatprep.subr.mxu0 0.0
    %312 = vmatpush1.msra.mxu0 %v284
    %313 = vmatprep.subr.mxu0 0.0
    %314 = vmatpush1.msra.mxu0 %v285
    %315 = vmatprep.subr.mxu0 0.0
    %316 = vmatpush1.msra.mxu0 %v286
    %317 = vmatprep.subr.mxu0 0.0
    %318 = vmatpush1.msra.mxu0 %v287
    %319 = vmatprep.subr.mxu0 0.0
    %320 = vmatpush1.msra.mxu0 %v288
    %321 = vmatprep.subr.mxu0 0.0
    %322 = vmatpush1.msra.mxu0 %v289
    %323 = vmatprep.subr.mxu0 0.0
    %324 = vmatpush1.msra.mxu0 %v290
    %325 = vmatprep.subr.mxu0 0.0
    %326 = vmatpush1.msra.mxu0 %v291
    %327 = vmatprep.subr.mxu0 0.0
    %328 = vmatpush1.msra.mxu0 %v292
    %329 = vmatprep.subr.mxu0 0.0
    %330 = vmatpush1.msra.mxu0 %v293
    %331 = vmatprep.subr.mxu0 0.0
    %332 = vmatpush1.msra.mxu0 0.0
    %333 = vmatprep.subr.mxu0 0.0
    %334 = vmatpush1.msra.mxu0 0.0
    %335 = vmatprep.subr.mxu0 0.0
    %336 = vmatpush1.msra.mxu0 0.0
    %337 = vmatprep.subr.mxu0 0.0
    %338 = vmatpush1.msra.mxu0 0.0
    %339 = vmatprep.subr.mxu0 0.0
    %340 = vmatpush1.msra.mxu0 0.0
    %341 = vmatprep.subr.mxu0 0.0
    %342 = vmatpush1.msra.mxu0 0.0
    %343 = vmatprep.subr.mxu0 0.0
    %344 = vmatpush1.msra.mxu0 0.0
    %345 = vmatprep.subr.mxu0 0.0
    %346 = vmatpush1.msra.mxu0 0.0
    %347 = vmatprep.subr.mxu0 0.0
    %348 = vmatpush1.msra.mxu0 0.0
    %349 = vmatprep.subr.mxu0 0.0
    %350 = vmatpush1.msra.mxu0 0.0
    %351 = vmatprep.subr.mxu0 0.0
    %352 = vmatpush1.msra.mxu0 0.0
    %353 = vmatprep.subr.mxu0 0.0
    %354 = vmatpush1.msra.mxu0 0.0
    %355 = vmatprep.subr.mxu0 0.0
    %356 = vmatpush1.msra.mxu0 0.0
    %357 = vmatprep.subr.mxu0 0.0
    %358 = vmatpush1.msra.mxu0 0.0
    %359 = vmatprep.subr.mxu0 0.0
    %360 = vmatpush1.msra.mxu0 0.0
    %361 = vmatprep.subr.mxu0 0.0
    %362 = vmatpush1.msra.mxu0 0.0
    %363 = vmatprep.subr.mxu0 0.0
    %364 = vmatpush1.msra.mxu0 0.0
    %365 = vmatprep.subr.mxu0 0.0
    %366 = vmatpush1.msra.mxu0 0.0
    %367 = vmatprep.subr.mxu0 0.0
    %368 = vmatpush1.msra.mxu0 0.0
    %369 = vmatprep.subr.mxu0 0.0
    %370 = vmatpush1.msra.mxu0 0.0
    %371 = vmatprep.mubr.f32.mxu0 0.0
    %372 = vmatmul.mubr.f32.gmra.mrb[0].mxu0 %v296
    %v373 = vpop.f32.mrb[0].mxu0
    %v374 = vadd.f32 0.0, %v373
    %v375 = vpop.f32.mrb[0].mxu0
    %376 = vmatprep.mubr.f32.mxu0 0.0
    %377 = vmatmul.mubr.f32.gmra.mrb[0].mxu0 %v299
    %v378 = vpop.f32.mrb[0].mxu0
    %v379 = vadd.f32 0.0, %v378
    %v380 = vpop.f32.mrb[0].mxu0
    %381 = vmatprep.mubr.f32.mxu0 0.0
    %382 = vmatmul.mubr.f32.gmra.mrb[0].mxu0 %v302
    %v383 = vpop.f32.mrb[0].mxu0
    %v384 = vadd.f32 0.0, %v383
    %v385 = vpop.f32.mrb[0].mxu0
    %386 = vmatprep.mubr.f32.mxu0 0.0
    %387 = vmatmul.mubr.f32.gmra.mrb[0].mxu0 %v305
    %v388 = vpop.f32.mrb[0].mxu0
    %v389 = vadd.f32 0.0, %v388
    %v390 = vpop.f32.mrb[0].mxu0
    %391 = vdwg.mxu0
    %vm392 = vcmask 130048
    %v393 = vsel %vm392, %v374, -inf
    %v394 = vsel %vm392, %v379, -inf
    %v395 = vmax.f32 %v393, %v394
    %v396 = vrot.slane %v395, 4
    %v397 = vmax.f32 %v395, %v396
    %v398 = vrot.slane %v397, 2
    %v399 = vmax.f32 %v397, %v398
    %v400 = vrot.slane %v399, 1
    %v401 = vmax.f32 %v399, %v400
    %v402 = vsel %vm392, %v384, -inf
    %v403 = vsel %vm392, %v389, -inf
    %v404 = vmax.f32 %v402, %v403
    %v405 = vrot.slane %v404, 4
    %v406 = vmax.f32 %v404, %v405
    %v407 = vrot.slane %v406, 2
    %v408 = vmax.f32 %v406, %v407
    %v409 = vrot.slane %v408, 1
    %v410 = vmax.f32 %v408, %v409
    %v411 = vld [vmem:[%s3] sm:$0x1]
    %v413 = vlaneseq
    %v414 = vshrl.u32 %v413, 7
    %v415 = vsub.s32 0, %v414
    %v416 = vrot.slane %v411, %v415
    %v418 = vadd.f32 %v401, %v416
    %v419 = vadd.f32 %v410, %v416
    %v420 = vmax.f32 %v418, 0.0
    %v421 = vmax.f32 %v419, 0.0
    %v422 = vld [vmem:[%s4] sm:$0xff]
    %v423 = vld [vmem:[%s4 + $0x8] sm:$0xff]
    %v424 = vld [vmem:[%s5] sm:$0x1]
    %v426 = vlaneseq
    %v427 = vshrl.u32 %v426, 7
    %v428 = vsub.s32 0, %v427
    %v429 = vrot.slane %v424, %v428
    %v433 = vrot.slane %v421, 7
    %vm434 = vcmask 1041409
    %v435 = vsel %vm434, %v433, %v420
    %v436 = vsel %vm392, %v435, 0
    %438 = vmatprep.subr.mxu0 0.0
    %439 = vmatpush1.msra.mxu0 %v422
    %440 = vmatprep.subr.mxu0 0.0
    %441 = vmatpush1.msra.mxu0 %v423
    %442 = vmatprep.subr.mxu0 0.0
    %443 = vmatpush1.msra.mxu0 0.0
    %444 = vmatprep.subr.mxu0 0.0
    %445 = vmatpush1.msra.mxu0 0.0
    %446 = vmatprep.subr.mxu0 0.0
    %447 = vmatpush1.msra.mxu0 0.0
    %448 = vmatprep.subr.mxu0 0.0
    %449 = vmatpush1.msra.mxu0 0.0
    %450 = vmatprep.subr.mxu0 0.0
    %451 = vmatpush1.msra.mxu0 0.0
    %452 = vmatprep.subr.mxu0 0.0
    %453 = vmatpush1.msra.mxu0 0.0
    %454 = vmatprep.subr.mxu0 0.0
    %455 = vmatpush1.msra.mxu0 0.0
    %456 = vmatprep.subr.mxu0 0.0
    %457 = vmatpush1.msra.mxu0 0.0
    %458 = vmatprep.subr.mxu0 0.0
    %459 = vmatpush1.msra.mxu0 0.0
    %460 = vmatprep.subr.mxu0 0.0
    %461 = vmatpush1.msra.mxu0 0.0
    %462 = vmatprep.subr.mxu0 0.0
    %463 = vmatpush1.msra.mxu0 0.0
    %464 = vmatprep.subr.mxu0 0.0
    %465 = vmatpush1.msra.mxu0 0.0
    %466 = vmatprep.subr.mxu0 0.0
    %467 = vmatpush1.msra.mxu0 0.0
    %468 = vmatprep.subr.mxu0 0.0
    %469 = vmatpush1.msra.mxu0 0.0
    %470 = vmatprep.subr.mxu0 0.0
    %471 = vmatpush1.msra.mxu0 0.0
    %472 = vmatprep.subr.mxu0 0.0
    %473 = vmatpush1.msra.mxu0 0.0
    %474 = vmatprep.subr.mxu0 0.0
    %475 = vmatpush1.msra.mxu0 0.0
    %476 = vmatprep.subr.mxu0 0.0
    %477 = vmatpush1.msra.mxu0 0.0
    %478 = vmatprep.subr.mxu0 0.0
    %479 = vmatpush1.msra.mxu0 0.0
    %480 = vmatprep.subr.mxu0 0.0
    %481 = vmatpush1.msra.mxu0 0.0
    %482 = vmatprep.subr.mxu0 0.0
    %483 = vmatpush1.msra.mxu0 0.0
    %484 = vmatprep.subr.mxu0 0.0
    %485 = vmatpush1.msra.mxu0 0.0
    %486 = vmatprep.subr.mxu0 0.0
    %487 = vmatpush1.msra.mxu0 0.0
    %488 = vmatprep.subr.mxu0 0.0
    %489 = vmatpush1.msra.mxu0 0.0
    %490 = vmatprep.subr.mxu0 0.0
    %491 = vmatpush1.msra.mxu0 0.0
    %492 = vmatprep.subr.mxu0 0.0
    %493 = vmatpush1.msra.mxu0 0.0
    %494 = vmatprep.subr.mxu0 0.0
    %495 = vmatpush1.msra.mxu0 0.0
    %496 = vmatprep.subr.mxu0 0.0
    %497 = vmatpush1.msra.mxu0 0.0
    %498 = vmatprep.subr.mxu0 0.0
    %499 = vmatpush1.msra.mxu0 0.0
    %500 = vmatprep.subr.mxu0 0.0
    %501 = vmatpush1.msra.mxu0 0.0
    %502 = vmatprep.mubr.f32.mxu0 0.0
    %503 = vmatmul.mubr.f32.gmra.mrb[0].mxu0 %v436
    %v504 = vpop.f32.mrb[0].mxu0
    %v505 = vadd.f32 %v429, %v504
    %v506 = vpop.f32.mrb[0].mxu0
    %507 = vdwg.mxu0
    %vm508 = vcmask 58368
    %509 = vst.msk [vmem:[#allocation2] sm:$0x3] %vm508, %v505
    // Predicated region
    $region26: #{classify_forward.1} parent=1 // pred_check
      _
    $region27: #{classify_forward.1} parent=1 // pred_check_branch
      %511 = sbr.rel (0) target = $region29
    $region28: #{classify_forward.1} parent=1 // pred_region
      %s513 = ssub.s32 32, 32
      %514 = vsyncadd [#allocation3], %s513
      %s516 = sshll.u32 [#allocation2], 4
      %s517 = int_to_ptr.vmem [resolvable:$true] %s516
      %519 = dma.vmem_to_hbm [thread:$0]  %s517, 32, %s6, [#allocation3]
    $region29: #{classify_forward.1} parent=1 // pred_fallthru
      _
    // Predicated region
    $region30: #{classify_forward.1} parent=1 // pred_check
      _
    $region31: #{classify_forward.1} parent=1 // pred_check_branch
      %521 = sbr.rel (0) target = $region33
    $region32: #{classify_forward.1} parent=1 // pred_region
      %522 = dma.done [#allocation3], 32
    $region33: #{classify_forward.1} parent=1 // pred_fallthru
      _
    %523 = vsyncpa [#allocation3], 1

</llo_original>
